<compile_context>
chip_gen: v7x
topology: tpu7x:2x2x1
jax: 0.10.0
libtpu: 0.0.40
codegen_flags: <defaults>
</compile_context>

<pallas_src>
import functools

import jax
import jax.numpy as jnp
from jax import lax
from jax.experimental import pallas as pl
from jax.experimental.pallas import tpu as pltpu


def _sublane_multiple(dtype):
    return {1: 32, 2: 16, 4: 8}.get(jnp.dtype(dtype).itemsize, 8)


def _round_up(x, m):
    return ((x + m - 1) // m) * m


def _cdiv(a, b):
    return -(-a // b)


def _conv_bn_relu_kernel(x_ref, w_ref, scale_ref, shift_ref, o_ref, patch_ref,
                         *, N, kh, kw, Cp, Wp, Lpad, isrelu):
    # x_ref:     (N, Cp, Lflat)       row-flattened, zero-padded batch
    # w_ref:     (Op, kh*kw*Cp)       lane-dense weight slab
    # scale_ref: (Op, 1) f32          folded BN scale
    # shift_ref: (Op, 1) f32          folded conv-bias + BN shift
    # o_ref:     (N, Op, Lpad)        Lpad % 128 == 0 -> unmasked stores
    # patch_ref: (kh*kw*Cp, N*Lpad)   VMEM scratch: implicit-GEMM patch matrix
    for n in range(N):
        for idx in range(kh * kw):
            i, j = divmod(idx, kw)
            off = i * Wp + j                       # static shift per kernel tap
            patch_ref[idx * Cp:(idx + 1) * Cp, n * Lpad:(n + 1) * Lpad] = (
                x_ref[n, :, off:off + Lpad])
    # Single MXU contraction for the whole batch: (Op, K) @ (K, N*Lpad).
    acc = jnp.dot(w_ref[...], patch_ref[...],
                  preferred_element_type=jnp.float32)
    y = acc * scale_ref[...] + shift_ref[...]      # fused conv-bias + BN(eval)
    if isrelu:
        y = jnp.maximum(y, 0.0)
    y = y.astype(o_ref.dtype)
    for n in range(N):
        o_ref[n] = y[:, n * Lpad:(n + 1) * Lpad]   # 128-aligned, unmasked


@functools.partial(jax.jit,
                   static_argnames=("stride", "padding", "eps", "isrelu"))
def conv2d_bn_relu(x, weight, bias, gamma, beta, running_mean, running_var,
                   *, stride=1, padding=0, eps=1e-5, isrelu=True):
    N, C, H, W = x.shape
    O, _, kh, kw = weight.shape
    Hp, Wp = H + 2 * padding, W + 2 * padding
    OHf, OWf = Hp - kh + 1, Wp - kw + 1            # dense (stride-1) extents
    OH = (Hp - kh) // stride + 1
    OW = (Wp - kw) // stride + 1

    dt = x.dtype
    sub = _sublane_multiple(dt)
    Cp = _round_up(C, sub)                         # dtype-aware channel pad
    Op = _round_up(O, sub)                         # dtype-aware out-chan pad
    KK = kh * kw * Cp

    L = OHf * Wp                                   # per-sample flat output
    Lpad = _round_up(L, 128)                       # lane-dense output block
    max_off = (kh - 1) * Wp + (kw - 1)
    rows_total = max(Hp, _cdiv(max_off + Lpad, Wp))  # bottom halo absorbs tail
    Lflat = rows_total * Wp

    # --- input: ONE zero-pad (channels + top/left/right halo + bottom halo
    #     rows covering the flat tail), then a row-flattening reshape.
    xp = jnp.pad(x, ((0, 0), (0, Cp - C),
                     (padding, rows_total - H - padding),
                     (padding, padding)))
    xf = xp.reshape(N, Cp, Lflat)

    # --- weights: one lane-dense (Op, kh*kw*Cp) slab; K ordered (i, j, c)
    #     to match the patch-matrix rows built in the kernel.
    wk = jnp.pad(weight, ((0, Op - O), (0, Cp - C), (0, 0), (0, 0)))
    wk = wk.transpose(0, 2, 3, 1).reshape(Op, KK).astype(dt)

    # --- fold conv bias + BatchNorm (running stats) into per-channel
    #     scale/shift (f32 epilogue).
    scale = (gamma / jnp.sqrt(running_var + eps)).astype(jnp.float32)
    b = bias if bias is not None else jnp.zeros((O,), jnp.float32)
    shift = ((b - running_mean) * scale + beta).astype(jnp.float32)
    scale2 = jnp.pad(scale, (0, Op - O)).reshape(Op, 1)
    shift2 = jnp.pad(shift, (0, Op - O)).reshape(Op, 1)

    kernel = functools.partial(_conv_bn_relu_kernel, N=N, kh=kh, kw=kw,
                               Cp=Cp, Wp=Wp, Lpad=Lpad, isrelu=isrelu)
    out = pl.pallas_call(
        kernel,
        out_shape=jax.ShapeDtypeStruct((N, Op, Lpad), dt),
        grid=(1,),
        in_specs=[
            pl.BlockSpec((N, Cp, Lflat), lambda i: (0, 0, 0)),
            pl.BlockSpec((Op, KK), lambda i: (0, 0)),
            pl.BlockSpec((Op, 1), lambda i: (0, 0)),
            pl.BlockSpec((Op, 1), lambda i: (0, 0)),
        ],
        out_specs=pl.BlockSpec((N, Op, Lpad), lambda i: (0, 0, 0)),
        scratch_shapes=[pltpu.VMEM((KK, N * Lpad), dt)],
        compiler_params=pltpu.CompilerParams(
            dimension_semantics=("arbitrary",)),
    )(xf, wk, scale2, shift2)

    # --- (N, Op, Lpad) -> NCHW: single fused crop (slice + reshape) under jit.
    out = out[:, :O, :L].reshape(N, O, OHf, Wp)
    if stride > 1:
        out = out[:, :, ::stride, :OWf:stride]
    else:
        out = out[:, :, :, :OWf]
    # TODO(synk): Dropout2d(p=0.1) is identity in eval mode; training-mode
    # stochastic channel dropout and batch-statistics BN are not implemented
    # (eval-mode semantics only).
    return out


if __name__ == "__main__":
    key = jax.random.PRNGKey(0)
    k_x, k_w, k_b, k_g, k_be, k_m, k_v = jax.random.split(key, 7)

    # module config: Conv2d(in=4, out=8, kernel_size=3, stride=1, padding=1)
    N, C, H, W = 2, 4, 16, 16
    O, kh, kw = 8, 3, 3
    stride, padding, eps, isrelu = 1, 1, 1e-5, True

    x = jax.random.normal(k_x, (N, C, H, W), jnp.float32)
    weight = jax.random.normal(k_w, (O, C, kh, kw), jnp.float32) * 0.1
    bias = jax.random.normal(k_b, (O,), jnp.float32) * 0.1
    gamma = 1.0 + 0.1 * jax.random.normal(k_g, (O,), jnp.float32)
    beta = 0.1 * jax.random.normal(k_be, (O,), jnp.float32)
    running_mean = 0.1 * jax.random.normal(k_m, (O,), jnp.float32)
    running_var = jnp.abs(jax.random.normal(k_v, (O,), jnp.float32)) + 0.5

    out = conv2d_bn_relu(x, weight, bias, gamma, beta, running_mean,
                         running_var, stride=stride, padding=padding,
                         eps=eps, isrelu=isrelu)
    out = jax.block_until_ready(out)

    # pure-JAX reference (conv -> BN(eval) -> ReLU -> Dropout2d = identity)
    ref = lax.conv_general_dilated(
        x, weight, (stride, stride), [(padding, padding), (padding, padding)],
        dimension_numbers=("NCHW", "OIHW", "NCHW"))
    ref = ref + bias.reshape(1, O, 1, 1)
    ref = ((ref - running_mean.reshape(1, O, 1, 1))
           / jnp.sqrt(running_var.reshape(1, O, 1, 1) + eps)
           * gamma.reshape(1, O, 1, 1) + beta.reshape(1, O, 1, 1))
    if isrelu:
        ref = jnp.maximum(ref, 0.0)

    assert out.shape == (N, O, H, W), out.shape
    assert jnp.allclose(out, ref, rtol=1e-4, atol=1e-4), \
        float(jnp.max(jnp.abs(out - ref)))
    print("KERNEL_OK")
</pallas_src>

<mosaic_0001>
module attributes {stable_mosaic.version = 11 : i64} {
  func.func @_conv_bn_relu_kernel(%arg0: i32, %arg1: memref<2x8x432xf32, #tpu.memory_space<vmem>>, %arg2: memref<8x72xf32, #tpu.memory_space<vmem>>, %arg3: memref<8x1xf32, #tpu.memory_space<vmem>>, %arg4: memref<8x1xf32, #tpu.memory_space<vmem>>, %arg5: memref<2x8x384xf32, #tpu.memory_space<vmem>>, %arg6: memref<72x768xf32, #tpu.memory_space<vmem>>) attributes {dimension_semantics = [#tpu.dimension_semantics<arbitrary>], iteration_bounds = array<i64: 1>, scalar_prefetch = 0 : i64, scratch_operands = 1 : i64, tpu.core_type = #tpu.core_type<tc>, window_params = [{pipeline_mode = #tpu.pipeline_mode<synchronous>, transform_indices = @transform_0, window_bounds = array<i64: 2, 8, 432>}, {pipeline_mode = #tpu.pipeline_mode<synchronous>, transform_indices = @transform_1, window_bounds = array<i64: 8, 72>}, {pipeline_mode = #tpu.pipeline_mode<synchronous>, transform_indices = @transform_2, window_bounds = array<i64: 8, 1>}, {pipeline_mode = #tpu.pipeline_mode<synchronous>, transform_indices = @transform_3, window_bounds = array<i64: 8, 1>}, {pipeline_mode = #tpu.pipeline_mode<synchronous>, transform_indices = @transform_4, window_bounds = array<i64: 2, 8, 384>}]} {
    %c0 = arith.constant 0 : index
    %c0_0 = arith.constant 0 : index
    %c0_1 = arith.constant 0 : index
    %0 = vector.load %arg1[%c0, %c0_0, %c0_1] : memref<2x8x432xf32, #tpu.memory_space<vmem>>, vector<1x8x384xf32>
    %1 = vector.shape_cast %0 : vector<1x8x384xf32> to vector<8x384xf32>
    %c0_2 = arith.constant 0 : index
    %c0_3 = arith.constant 0 : index
    %2 = vector.load %arg6[%c0_2, %c0_3] : memref<72x768xf32, #tpu.memory_space<vmem>>, vector<8x384xf32>
    tpu.vector_store %arg6[%c0_2, %c0_3], %1 {strides = array<i32>} : memref<72x768xf32, #tpu.memory_space<vmem>>, vector<8x384xf32>,
    %c0_4 = arith.constant 0 : index
    %c0_5 = arith.constant 0 : index
    %c1 = arith.constant 1 : index
    %3 = vector.load %arg1[%c0_4, %c0_5, %c1] : memref<2x8x432xf32, #tpu.memory_space<vmem>>, vector<1x8x384xf32>
    %4 = vector.shape_cast %3 : vector<1x8x384xf32> to vector<8x384xf32>
    %c8 = arith.constant 8 : index
    %c0_6 = arith.constant 0 : index
    %5 = vector.load %arg6[%c8, %c0_6] : memref<72x768xf32, #tpu.memory_space<vmem>>, vector<8x384xf32>
    tpu.vector_store %arg6[%c8, %c0_6], %4 {strides = array<i32>} : memref<72x768xf32, #tpu.memory_space<vmem>>, vector<8x384xf32>,
    %c0_7 = arith.constant 0 : index
    %c0_8 = arith.constant 0 : index
    %c2 = arith.constant 2 : index
    %6 = vector.load %arg1[%c0_7, %c0_8, %c2] : memref<2x8x432xf32, #tpu.memory_space<vmem>>, vector<1x8x384xf32>
    %7 = vector.shape_cast %6 : vector<1x8x384xf32> to vector<8x384xf32>
    %c16 = arith.constant 16 : index
    %c0_9 = arith.constant 0 : index
    %8 = vector.load %arg6[%c16, %c0_9] : memref<72x768xf32, #tpu.memory_space<vmem>>, vector<8x384xf32>
    tpu.vector_store %arg6[%c16, %c0_9], %7 {strides = array<i32>} : memref<72x768xf32, #tpu.memory_space<vmem>>, vector<8x384xf32>,
    %c0_10 = arith.constant 0 : index
    %c0_11 = arith.constant 0 : index
    %c18 = arith.constant 18 : index
    %9 = vector.load %arg1[%c0_10, %c0_11, %c18] : memref<2x8x432xf32, #tpu.memory_space<vmem>>, vector<1x8x384xf32>
    %10 = vector.shape_cast %9 : vector<1x8x384xf32> to vector<8x384xf32>
    %c24 = arith.constant 24 : index
    %c0_12 = arith.constant 0 : index
    %11 = vector.load %arg6[%c24, %c0_12] : memref<72x768xf32, #tpu.memory_space<vmem>>, vector<8x384xf32>
    tpu.vector_store %arg6[%c24, %c0_12], %10 {strides = array<i32>} : memref<72x768xf32, #tpu.memory_space<vmem>>, vector<8x384xf32>,
    %c0_13 = arith.constant 0 : index
    %c0_14 = arith.constant 0 : index
    %c19 = arith.constant 19 : index
    %12 = vector.load %arg1[%c0_13, %c0_14, %c19] : memref<2x8x432xf32, #tpu.memory_space<vmem>>, vector<1x8x384xf32>
    %13 = vector.shape_cast %12 : vector<1x8x384xf32> to vector<8x384xf32>
    %c32 = arith.constant 32 : index
    %c0_15 = arith.constant 0 : index
    %14 = vector.load %arg6[%c32, %c0_15] : memref<72x768xf32, #tpu.memory_space<vmem>>, vector<8x384xf32>
    tpu.vector_store %arg6[%c32, %c0_15], %13 {strides = array<i32>} : memref<72x768xf32, #tpu.memory_space<vmem>>, vector<8x384xf32>,
    %c0_16 = arith.constant 0 : index
    %c0_17 = arith.constant 0 : index
    %c20 = arith.constant 20 : index
    %15 = vector.load %arg1[%c0_16, %c0_17, %c20] : memref<2x8x432xf32, #tpu.memory_space<vmem>>, vector<1x8x384xf32>
    %16 = vector.shape_cast %15 : vector<1x8x384xf32> to vector<8x384xf32>
    %c40 = arith.constant 40 : index
    %c0_18 = arith.constant 0 : index
    %17 = vector.load %arg6[%c40, %c0_18] : memref<72x768xf32, #tpu.memory_space<vmem>>, vector<8x384xf32>
    tpu.vector_store %arg6[%c40, %c0_18], %16 {strides = array<i32>} : memref<72x768xf32, #tpu.memory_space<vmem>>, vector<8x384xf32>,
    %c0_19 = arith.constant 0 : index
    %c0_20 = arith.constant 0 : index
    %c36 = arith.constant 36 : index
    %18 = vector.load %arg1[%c0_19, %c0_20, %c36] : memref<2x8x432xf32, #tpu.memory_space<vmem>>, vector<1x8x384xf32>
    %19 = vector.shape_cast %18 : vector<1x8x384xf32> to vector<8x384xf32>
    %c48 = arith.constant 48 : index
    %c0_21 = arith.constant 0 : index
    %20 = vector.load %arg6[%c48, %c0_21] : memref<72x768xf32, #tpu.memory_space<vmem>>, vector<8x384xf32>
    tpu.vector_store %arg6[%c48, %c0_21], %19 {strides = array<i32>} : memref<72x768xf32, #tpu.memory_space<vmem>>, vector<8x384xf32>,
    %c0_22 = arith.constant 0 : index
    %c0_23 = arith.constant 0 : index
    %c37 = arith.constant 37 : index
    %21 = vector.load %arg1[%c0_22, %c0_23, %c37] : memref<2x8x432xf32, #tpu.memory_space<vmem>>, vector<1x8x384xf32>
    %22 = vector.shape_cast %21 : vector<1x8x384xf32> to vector<8x384xf32>
    %c56 = arith.constant 56 : index
    %c0_24 = arith.constant 0 : index
    %23 = vector.load %arg6[%c56, %c0_24] : memref<72x768xf32, #tpu.memory_space<vmem>>, vector<8x384xf32>
    tpu.vector_store %arg6[%c56, %c0_24], %22 {strides = array<i32>} : memref<72x768xf32, #tpu.memory_space<vmem>>, vector<8x384xf32>,
    %c0_25 = arith.constant 0 : index
    %c0_26 = arith.constant 0 : index
    %c38 = arith.constant 38 : index
    %24 = vector.load %arg1[%c0_25, %c0_26, %c38] : memref<2x8x432xf32, #tpu.memory_space<vmem>>, vector<1x8x384xf32>
    %25 = vector.shape_cast %24 : vector<1x8x384xf32> to vector<8x384xf32>
    %c64 = arith.constant 64 : index
    %c0_27 = arith.constant 0 : index
    %26 = vector.load %arg6[%c64, %c0_27] : memref<72x768xf32, #tpu.memory_space<vmem>>, vector<8x384xf32>
    tpu.vector_store %arg6[%c64, %c0_27], %25 {strides = array<i32>} : memref<72x768xf32, #tpu.memory_space<vmem>>, vector<8x384xf32>,
    %c1_28 = arith.constant 1 : index
    %c0_29 = arith.constant 0 : index
    %c0_30 = arith.constant 0 : index
    %27 = vector.load %arg1[%c1_28, %c0_29, %c0_30] : memref<2x8x432xf32, #tpu.memory_space<vmem>>, vector<1x8x384xf32>
    %28 = vector.shape_cast %27 : vector<1x8x384xf32> to vector<8x384xf32>
    %c0_31 = arith.constant 0 : index
    %c384 = arith.constant 384 : index
    %29 = vector.load %arg6[%c0_31, %c384] : memref<72x768xf32, #tpu.memory_space<vmem>>, vector<8x384xf32>
    tpu.vector_store %arg6[%c0_31, %c384], %28 {strides = array<i32>} : memref<72x768xf32, #tpu.memory_space<vmem>>, vector<8x384xf32>,
    %c1_32 = arith.constant 1 : index
    %c0_33 = arith.constant 0 : index
    %c1_34 = arith.constant 1 : index
    %30 = vector.load %arg1[%c1_32, %c0_33, %c1_34] : memref<2x8x432xf32, #tpu.memory_space<vmem>>, vector<1x8x384xf32>
    %31 = vector.shape_cast %30 : vector<1x8x384xf32> to vector<8x384xf32>
    %c8_35 = arith.constant 8 : index
    %c384_36 = arith.constant 384 : index
    %32 = vector.load %arg6[%c8_35, %c384_36] : memref<72x768xf32, #tpu.memory_space<vmem>>, vector<8x384xf32>
    tpu.vector_store %arg6[%c8_35, %c384_36], %31 {strides = array<i32>} : memref<72x768xf32, #tpu.memory_space<vmem>>, vector<8x384xf32>,
    %c1_37 = arith.constant 1 : index
    %c0_38 = arith.constant 0 : index
    %c2_39 = arith.constant 2 : index
    %33 = vector.load %arg1[%c1_37, %c0_38, %c2_39] : memref<2x8x432xf32, #tpu.memory_space<vmem>>, vector<1x8x384xf32>
    %34 = vector.shape_cast %33 : vector<1x8x384xf32> to vector<8x384xf32>
    %c16_40 = arith.constant 16 : index
    %c384_41 = arith.constant 384 : index
    %35 = vector.load %arg6[%c16_40, %c384_41] : memref<72x768xf32, #tpu.memory_space<vmem>>, vector<8x384xf32>
    tpu.vector_store %arg6[%c16_40, %c384_41], %34 {strides = array<i32>} : memref<72x768xf32, #tpu.memory_space<vmem>>, vector<8x384xf32>,
    %c1_42 = arith.constant 1 : index
    %c0_43 = arith.constant 0 : index
    %c18_44 = arith.constant 18 : index
    %36 = vector.load %arg1[%c1_42, %c0_43, %c18_44] : memref<2x8x432xf32, #tpu.memory_space<vmem>>, vector<1x8x384xf32>
    %37 = vector.shape_cast %36 : vector<1x8x384xf32> to vector<8x384xf32>
    %c24_45 = arith.constant 24 : index
    %c384_46 = arith.constant 384 : index
    %38 = vector.load %arg6[%c24_45, %c384_46] : memref<72x768xf32, #tpu.memory_space<vmem>>, vector<8x384xf32>
    tpu.vector_store %arg6[%c24_45, %c384_46], %37 {strides = array<i32>} : memref<72x768xf32, #tpu.memory_space<vmem>>, vector<8x384xf32>,
    %c1_47 = arith.constant 1 : index
    %c0_48 = arith.constant 0 : index
    %c19_49 = arith.constant 19 : index
    %39 = vector.load %arg1[%c1_47, %c0_48, %c19_49] : memref<2x8x432xf32, #tpu.memory_space<vmem>>, vector<1x8x384xf32>
    %40 = vector.shape_cast %39 : vector<1x8x384xf32> to vector<8x384xf32>
    %c32_50 = arith.constant 32 : index
    %c384_51 = arith.constant 384 : index
    %41 = vector.load %arg6[%c32_50, %c384_51] : memref<72x768xf32, #tpu.memory_space<vmem>>, vector<8x384xf32>
    tpu.vector_store %arg6[%c32_50, %c384_51], %40 {strides = array<i32>} : memref<72x768xf32, #tpu.memory_space<vmem>>, vector<8x384xf32>,
    %c1_52 = arith.constant 1 : index
    %c0_53 = arith.constant 0 : index
    %c20_54 = arith.constant 20 : index
    %42 = vector.load %arg1[%c1_52, %c0_53, %c20_54] : memref<2x8x432xf32, #tpu.memory_space<vmem>>, vector<1x8x384xf32>
    %43 = vector.shape_cast %42 : vector<1x8x384xf32> to vector<8x384xf32>
    %c40_55 = arith.constant 40 : index
    %c384_56 = arith.constant 384 : index
    %44 = vector.load %arg6[%c40_55, %c384_56] : memref<72x768xf32, #tpu.memory_space<vmem>>, vector<8x384xf32>
    tpu.vector_store %arg6[%c40_55, %c384_56], %43 {strides = array<i32>} : memref<72x768xf32, #tpu.memory_space<vmem>>, vector<8x384xf32>,
    %c1_57 = arith.constant 1 : index
    %c0_58 = arith.constant 0 : index
    %c36_59 = arith.constant 36 : index
    %45 = vector.load %arg1[%c1_57, %c0_58, %c36_59] : memref<2x8x432xf32, #tpu.memory_space<vmem>>, vector<1x8x384xf32>
    %46 = vector.shape_cast %45 : vector<1x8x384xf32> to vector<8x384xf32>
    %c48_60 = arith.constant 48 : index
    %c384_61 = arith.constant 384 : index
    %47 = vector.load %arg6[%c48_60, %c384_61] : memref<72x768xf32, #tpu.memory_space<vmem>>, vector<8x384xf32>
    tpu.vector_store %arg6[%c48_60, %c384_61], %46 {strides = array<i32>} : memref<72x768xf32, #tpu.memory_space<vmem>>, vector<8x384xf32>,
    %c1_62 = arith.constant 1 : index
    %c0_63 = arith.constant 0 : index
    %c37_64 = arith.constant 37 : index
    %48 = vector.load %arg1[%c1_62, %c0_63, %c37_64] : memref<2x8x432xf32, #tpu.memory_space<vmem>>, vector<1x8x384xf32>
    %49 = vector.shape_cast %48 : vector<1x8x384xf32> to vector<8x384xf32>
    %c56_65 = arith.constant 56 : index
    %c384_66 = arith.constant 384 : index
    %50 = vector.load %arg6[%c56_65, %c384_66] : memref<72x768xf32, #tpu.memory_space<vmem>>, vector<8x384xf32>
    tpu.vector_store %arg6[%c56_65, %c384_66], %49 {strides = array<i32>} : memref<72x768xf32, #tpu.memory_space<vmem>>, vector<8x384xf32>,
    %c1_67 = arith.constant 1 : index
    %c0_68 = arith.constant 0 : index
    %c38_69 = arith.constant 38 : index
    %51 = vector.load %arg1[%c1_67, %c0_68, %c38_69] : memref<2x8x432xf32, #tpu.memory_space<vmem>>, vector<1x8x384xf32>
    %52 = vector.shape_cast %51 : vector<1x8x384xf32> to vector<8x384xf32>
    %c64_70 = arith.constant 64 : index
    %c384_71 = arith.constant 384 : index
    %53 = vector.load %arg6[%c64_70, %c384_71] : memref<72x768xf32, #tpu.memory_space<vmem>>, vector<8x384xf32>
    tpu.vector_store %arg6[%c64_70, %c384_71], %52 {strides = array<i32>} : memref<72x768xf32, #tpu.memory_space<vmem>>, vector<8x384xf32>,
    %c0_72 = arith.constant 0 : index
    %c0_73 = arith.constant 0 : index
    %54 = vector.load %arg2[%c0_72, %c0_73] : memref<8x72xf32, #tpu.memory_space<vmem>>, vector<8x72xf32>
    %c0_74 = arith.constant 0 : index
    %c0_75 = arith.constant 0 : index
    %55 = vector.load %arg6[%c0_74, %c0_75] : memref<72x768xf32, #tpu.memory_space<vmem>>, vector<72x768xf32>
    %cst = arith.constant dense<0.000000e+00> : vector<8x768xf32>
    %56 = tpu.matmul %54, %55, %cst {dimension_numbers = #tpu.dot_dimension_numbers<[1], [0], [0], [1], [0, 0, 1, 1], [], []>} : vector<8x72xf32>, vector<72x768xf32>, vector<8x768xf32> -> vector<8x768xf32>
    %c0_76 = arith.constant 0 : index
    %c0_77 = arith.constant 0 : index
    %57 = vector.load %arg3[%c0_76, %c0_77] : memref<8x1xf32, #tpu.memory_space<vmem>>, vector<8x1xf32>
    %58 = vector.broadcast %57 : vector<8x1xf32> to vector<8x768xf32>
    %59 = arith.mulf %56, %58 : vector<8x768xf32>
    %c0_78 = arith.constant 0 : index
    %c0_79 = arith.constant 0 : index
    %60 = vector.load %arg4[%c0_78, %c0_79] : memref<8x1xf32, #tpu.memory_space<vmem>>, vector<8x1xf32>
    %61 = vector.broadcast %60 : vector<8x1xf32> to vector<8x768xf32>
    %62 = arith.addf %59, %61 : vector<8x768xf32>
    %cst_80 = arith.constant 0.000000e+00 : f32
    %63 = vector.broadcast %cst_80 : f32 to vector<8x768xf32>
    %64 = arith.maximumf %62, %63 : vector<8x768xf32>
    %65 = vector.extract_strided_slice %64 {offsets = [0, 0], sizes = [8, 384], strides = [1, 1]} : vector<8x768xf32> to vector<8x384xf32>
    %c0_81 = arith.constant 0 : index
    %c0_82 = arith.constant 0 : index
    %c0_83 = arith.constant 0 : index
    %66 = vector.load %arg5[%c0_81, %c0_82, %c0_83] : memref<2x8x384xf32, #tpu.memory_space<vmem>>, vector<1x8x384xf32>
    %67 = vector.shape_cast %66 : vector<1x8x384xf32> to vector<8x384xf32>
    %68 = vector.shape_cast %65 : vector<8x384xf32> to vector<1x8x384xf32>
    tpu.vector_store %arg5[%c0_81, %c0_82, %c0_83], %68 {strides = array<i32>} : memref<2x8x384xf32, #tpu.memory_space<vmem>>, vector<1x8x384xf32>,
    %69 = vector.extract_strided_slice %64 {offsets = [0, 384], sizes = [8, 384], strides = [1, 1]} : vector<8x768xf32> to vector<8x384xf32>
    %c1_84 = arith.constant 1 : index
    %c0_85 = arith.constant 0 : index
    %c0_86 = arith.constant 0 : index
    %70 = vector.load %arg5[%c1_84, %c0_85, %c0_86] : memref<2x8x384xf32, #tpu.memory_space<vmem>>, vector<1x8x384xf32>
    %71 = vector.shape_cast %70 : vector<1x8x384xf32> to vector<8x384xf32>
    %72 = vector.shape_cast %69 : vector<8x384xf32> to vector<1x8x384xf32>
    tpu.vector_store %arg5[%c1_84, %c0_85, %c0_86], %72 {strides = array<i32>} : memref<2x8x384xf32, #tpu.memory_space<vmem>>, vector<1x8x384xf32>,
    return
  }
  func.func @transform_0(%arg0: i32) -> (i32, i32, i32) {
    %c0_i32 = arith.constant 0 : i32
    %c0_i32_0 = arith.constant 0 : i32
    %c0_i32_1 = arith.constant 0 : i32
    %c0_i32_2 = arith.constant 0 : i32
    return %c0_i32, %c0_i32_0, %c0_i32_1 : i32, i32, i32
  }
  func.func @transform_1(%arg0: i32) -> (i32, i32) {
    %c0_i32 = arith.constant 0 : i32
    %c0_i32_0 = arith.constant 0 : i32
    %c0_i32_1 = arith.constant 0 : i32
    return %c0_i32, %c0_i32_0 : i32, i32
  }
  func.func @transform_2(%arg0: i32) -> (i32, i32) {
    %c0_i32 = arith.constant 0 : i32
    %c0_i32_0 = arith.constant 0 : i32
    %c0_i32_1 = arith.constant 0 : i32
    return %c0_i32, %c0_i32_0 : i32, i32
  }
  func.func @transform_3(%arg0: i32) -> (i32, i32) {
    %c0_i32 = arith.constant 0 : i32
    %c0_i32_0 = arith.constant 0 : i32
    %c0_i32_1 = arith.constant 0 : i32
    return %c0_i32, %c0_i32_0 : i32, i32
  }
  func.func @transform_4(%arg0: i32) -> (i32, i32, i32) {
    %c0_i32 = arith.constant 0 : i32
    %c0_i32_0 = arith.constant 0 : i32
    %c0_i32_1 = arith.constant 0 : i32
    %c0_i32_2 = arith.constant 0 : i32
    return %c0_i32, %c0_i32_0, %c0_i32_1 : i32, i32, i32
  }
}

</mosaic_0001>

<llo_original>
// kernel: conv2d_bn_relu.1
$region0: #{conv2d_bn_relu.1}
  #allocation0 [shape = 'u32[]', space=smem, size = 0x4, offset = 0x4, fixed_abs, tag = 'smem constant byte address 0x4 - core index']
  #allocation1 [shape = 'u32[144,128]{1,0:T(1,128)}', space=vmem, size = 0x12000, scoped, tag = 'internal scratch']
  #allocation2 [shape = 'f32[72,768]{1,0:T(8,128)}', space=vmem, size = 0x36000, scoped, tag = 'scratch operand']
  %s0 = inlined_call_operand.vmem [shape: f32[2,8,432], index: 0, kind: input, shape index: {}]
  %s1 = inlined_call_operand.vmem [shape: f32[8,72], index: 1, kind: input, shape index: {}]
  %s2 = inlined_call_operand.vmem [shape: f32[8,1], index: 2, kind: input, shape index: {}]
  %s3 = inlined_call_operand.vmem [shape: f32[8,1], index: 3, kind: input, shape index: {}]
  %s4 = inlined_call_operand.vmem [shape: f32[2,8,384], index: 4, kind: output, shape index: {}]
  %s5 = sld [smem:[#allocation0]]
  $region26: #{conv2d_bn_relu.1} parent=0
    _
  %s7 = ssub.s32 1, %s5
  %s8 = scalar_select 0, %s7, %s5
  // Predicated region
  $region2: #{conv2d_bn_relu.1} parent=0 // pred_check
    _
  $region3: #{conv2d_bn_relu.1} parent=0 // pred_check_branch
    %10 = sbr.rel (0) target = $region5
  $region4: #{conv2d_bn_relu.1} parent=0 // pred_region
    _
  $region5: #{conv2d_bn_relu.1} parent=0 // pred_fallthru
    _
  // Predicated region
  $region6: #{conv2d_bn_relu.1} parent=0 // pred_check
    _
  $region7: #{conv2d_bn_relu.1} parent=0 // pred_check_branch
    %12 = sbr.rel (0) target = $region9
  $region8: #{conv2d_bn_relu.1} parent=0 // pred_region
    _
  $region9: #{conv2d_bn_relu.1} parent=0 // pred_fallthru
    _
  // Predicated region
  $region10: #{conv2d_bn_relu.1} parent=0 // pred_check
    _
  $region11: #{conv2d_bn_relu.1} parent=0 // pred_check_branch
    %14 = sbr.rel (0) target = $region13
  $region12: #{conv2d_bn_relu.1} parent=0 // pred_region
    _
  $region13: #{conv2d_bn_relu.1} parent=0 // pred_fallthru
    _
  // Predicated region
  $region14: #{conv2d_bn_relu.1} parent=0 // pred_check
    _
  $region15: #{conv2d_bn_relu.1} parent=0 // pred_check_branch
    %16 = sbr.rel (0) target = $region17
  $region16: #{conv2d_bn_relu.1} parent=0 // pred_region
    _
  $region17: #{conv2d_bn_relu.1} parent=0 // pred_fallthru
    _
  %v17 = vld [vmem:[%s0] sm:$0xff]
  %v18 = vld [vmem:[%s0 + $0x8] sm:$0xff]
  %v19 = vld [vmem:[%s0 + $0x10] sm:$0xff]
  %20 = vst [vmem:[#allocation2] sm:$0xff] %v17
  %21 = vst [vmem:[#allocation2 + $0x8] sm:$0xff] %v18
  %22 = vst [vmem:[#allocation2 + $0x10] sm:$0xff] %v19
  %v23 = vld [vmem:[%s0] sm:$0xff]
  %v24 = vld [vmem:[%s0 + $0x8] sm:$0xff]
  %v25 = vld [vmem:[%s0 + $0x10] sm:$0xff]
  %v26 = vld [vmem:[%s0 + $0x18] sm:$0xff]
  %31 = vrot.lane.b32.xlu0 %v23, 127
  %v32 = vpop.permute.xlu0 %31
  %33 = vrot.lane.b32.xlu0 %v24, 127
  %v34 = vpop.permute.xlu0 %33
  %35 = vrot.lane.b32.xlu0 %v25, 127
  %v36 = vpop.permute.xlu0 %35
  %37 = vrot.lane.b32.xlu0 %v26, 127
  %v38 = vpop.permute.xlu0 %37
  %vm39 = vcmask 1039360
  %v40 = vsel %vm39, %v32, %v34
  %v41 = vsel %vm39, %v34, %v36
  %v42 = vsel %vm39, %v36, %v38
  %46 = vst [vmem:[#allocation2 + $0x30] sm:$0xff] %v40
  %47 = vst [vmem:[#allocation2 + $0x38] sm:$0xff] %v41
  %48 = vst [vmem:[#allocation2 + $0x40] sm:$0xff] %v42
  %v49 = vld [vmem:[%s0] sm:$0xff]
  %v50 = vld [vmem:[%s0 + $0x8] sm:$0xff]
  %v51 = vld [vmem:[%s0 + $0x10] sm:$0xff]
  %v52 = vld [vmem:[%s0 + $0x18] sm:$0xff]
  %57 = vrot.lane.b32.xlu0 %v49, 126
  %v58 = vpop.permute.xlu0 %57
  %59 = vrot.lane.b32.xlu0 %v50, 126
  %v60 = vpop.permute.xlu0 %59
  %61 = vrot.lane.b32.xlu0 %v51, 126
  %v62 = vpop.permute.xlu0 %61
  %63 = vrot.lane.b32.xlu0 %v52, 126
  %v64 = vpop.permute.xlu0 %63
  %vm65 = vcmask 1031168
  %v66 = vsel %vm65, %v58, %v60
  %v67 = vsel %vm65, %v60, %v62
  %v68 = vsel %vm65, %v62, %v64
  %72 = vst [vmem:[#allocation2 + $0x60] sm:$0xff] %v66
  %73 = vst [vmem:[#allocation2 + $0x68] sm:$0xff] %v67
  %74 = vst [vmem:[#allocation2 + $0x70] sm:$0xff] %v68
  %v75 = vld [vmem:[%s0] sm:$0xff]
  %v76 = vld [vmem:[%s0 + $0x8] sm:$0xff]
  %v77 = vld [vmem:[%s0 + $0x10] sm:$0xff]
  %v78 = vld [vmem:[%s0 + $0x18] sm:$0xff]
  %83 = vrot.lane.b32.xlu0 %v75, 110
  %v84 = vpop.permute.xlu0 %83
  %85 = vrot.lane.b32.xlu0 %v76, 110
  %v86 = vpop.permute.xlu0 %85
  %87 = vrot.lane.b32.xlu0 %v77, 110
  %v88 = vpop.permute.xlu0 %87
  %89 = vrot.lane.b32.xlu0 %v78, 110
  %v90 = vpop.permute.xlu0 %89
  %vm91 = vcmask 900096
  %v92 = vsel %vm91, %v84, %v86
  %v93 = vsel %vm91, %v86, %v88
  %v94 = vsel %vm91, %v88, %v90
  %98 = vst [vmem:[#allocation2 + $0x90] sm:$0xff] %v92
  %99 = vst [vmem:[#allocation2 + $0x98] sm:$0xff] %v93
  %100 = vst [vmem:[#allocation2 + $0xa0] sm:$0xff] %v94
  %v101 = vld [vmem:[%s0] sm:$0xff]
  %v102 = vld [vmem:[%s0 + $0x8] sm:$0xff]
  %v103 = vld [vmem:[%s0 + $0x10] sm:$0xff]
  %v104 = vld [vmem:[%s0 + $0x18] sm:$0xff]
  %109 = vrot.lane.b32.xlu0 %v101, 109
  %v110 = vpop.permute.xlu0 %109
  %111 = vrot.lane.b32.xlu0 %v102, 109
  %v112 = vpop.permute.xlu0 %111
  %113 = vrot.lane.b32.xlu0 %v103, 109
  %v114 = vpop.permute.xlu0 %113
  %115 = vrot.lane.b32.xlu0 %v104, 109
  %v116 = vpop.permute.xlu0 %115
  %vm117 = vcmask 891904
  %v118 = vsel %vm117, %v110, %v112
  %v119 = vsel %vm117, %v112, %v114
  %v120 = vsel %vm117, %v114, %v116
  %124 = vst [vmem:[#allocation2 + $0xc0] sm:$0xff] %v118
  %125 = vst [vmem:[#allocation2 + $0xc8] sm:$0xff] %v119
  %126 = vst [vmem:[#allocation2 + $0xd0] sm:$0xff] %v120
  %v127 = vld [vmem:[%s0] sm:$0xff]
  %v128 = vld [vmem:[%s0 + $0x8] sm:$0xff]
  %v129 = vld [vmem:[%s0 + $0x10] sm:$0xff]
  %v130 = vld [vmem:[%s0 + $0x18] sm:$0xff]
  %135 = vrot.lane.b32.xlu0 %v127, 108
  %v136 = vpop.permute.xlu0 %135
  %137 = vrot.lane.b32.xlu0 %v128, 108
  %v138 = vpop.permute.xlu0 %137
  %139 = vrot.lane.b32.xlu0 %v129, 108
  %v140 = vpop.permute.xlu0 %139
  %141 = vrot.lane.b32.xlu0 %v130, 108
  %v142 = vpop.permute.xlu0 %141
  %vm143 = vcmask 883712
  %v144 = vsel %vm143, %v136, %v138
  %v145 = vsel %vm143, %v138, %v140
  %v146 = vsel %vm143, %v140, %v142
  %150 = vst [vmem:[#allocation2 + $0xf0] sm:$0xff] %v144
  %151 = vst [vmem:[#allocation2 + $0xf8] sm:$0xff] %v145
  %152 = vst [vmem:[#allocation2 + $0x100] sm:$0xff] %v146
  %v153 = vld [vmem:[%s0] sm:$0xff]
  %v154 = vld [vmem:[%s0 + $0x8] sm:$0xff]
  %v155 = vld [vmem:[%s0 + $0x10] sm:$0xff]
  %v156 = vld [vmem:[%s0 + $0x18] sm:$0xff]
  %161 = vrot.lane.b32.xlu0 %v153, 92
  %v162 = vpop.permute.xlu0 %161
  %163 = vrot.lane.b32.xlu0 %v154, 92
  %v164 = vpop.permute.xlu0 %163
  %165 = vrot.lane.b32.xlu0 %v155, 92
  %v166 = vpop.permute.xlu0 %165
  %167 = vrot.lane.b32.xlu0 %v156, 92
  %v168 = vpop.permute.xlu0 %167
  %vm169 = vcmask 752640
  %v170 = vsel %vm169, %v162, %v164
  %v171 = vsel %vm169, %v164, %v166
  %v172 = vsel %vm169, %v166, %v168
  %176 = vst [vmem:[#allocation2 + $0x120] sm:$0xff] %v170
  %177 = vst [vmem:[#allocation2 + $0x128] sm:$0xff] %v171
  %178 = vst [vmem:[#allocation2 + $0x130] sm:$0xff] %v172
  %v179 = vld [vmem:[%s0] sm:$0xff]
  %v180 = vld [vmem:[%s0 + $0x8] sm:$0xff]
  %v181 = vld [vmem:[%s0 + $0x10] sm:$0xff]
  %v182 = vld [vmem:[%s0 + $0x18] sm:$0xff]
  %187 = vrot.lane.b32.xlu0 %v179, 91
  %v188 = vpop.permute.xlu0 %187
  %189 = vrot.lane.b32.xlu0 %v180, 91
  %v190 = vpop.permute.xlu0 %189
  %191 = vrot.lane.b32.xlu0 %v181, 91
  %v192 = vpop.permute.xlu0 %191
  %193 = vrot.lane.b32.xlu0 %v182, 91
  %v194 = vpop.permute.xlu0 %193
  %vm195 = vcmask 744448
  %v196 = vsel %vm195, %v188, %v190
  %v197 = vsel %vm195, %v190, %v192
  %v198 = vsel %vm195, %v192, %v194
  %202 = vst [vmem:[#allocation2 + $0x150] sm:$0xff] %v196
  %203 = vst [vmem:[#allocation2 + $0x158] sm:$0xff] %v197
  %204 = vst [vmem:[#allocation2 + $0x160] sm:$0xff] %v198
  %v205 = vld [vmem:[%s0] sm:$0xff]
  %v206 = vld [vmem:[%s0 + $0x8] sm:$0xff]
  %v207 = vld [vmem:[%s0 + $0x10] sm:$0xff]
  %v208 = vld [vmem:[%s0 + $0x18] sm:$0xff]
  %213 = vrot.lane.b32.xlu0 %v205, 90
  %v214 = vpop.permute.xlu0 %213
  %215 = vrot.lane.b32.xlu0 %v206, 90
  %v216 = vpop.permute.xlu0 %215
  %217 = vrot.lane.b32.xlu0 %v207, 90
  %v218 = vpop.permute.xlu0 %217
  %219 = vrot.lane.b32.xlu0 %v208, 90
  %v220 = vpop.permute.xlu0 %219
  %vm221 = vcmask 736256
  %v222 = vsel %vm221, %v214, %v216
  %v223 = vsel %vm221, %v216, %v218
  %v224 = vsel %vm221, %v218, %v220
  %228 = vst [vmem:[#allocation2 + $0x180] sm:$0xff] %v222
  %229 = vst [vmem:[#allocation2 + $0x188] sm:$0xff] %v223
  %230 = vst [vmem:[#allocation2 + $0x190] sm:$0xff] %v224
  %s231 = scalar_lea.vmem %s0, 32
  %v232 = vld [vmem:[%s231] sm:$0xff]
  %v233 = vld [vmem:[%s231 + $0x8] sm:$0xff]
  %v234 = vld [vmem:[%s231 + $0x10] sm:$0xff]
  %235 = vst [vmem:[#allocation2 + $0x18] sm:$0xff] %v232
  %236 = vst [vmem:[#allocation2 + $0x20] sm:$0xff] %v233
  %237 = vst [vmem:[#allocation2 + $0x28] sm:$0xff] %v234
  %v238 = vld [vmem:[%s231] sm:$0xff]
  %v239 = vld [vmem:[%s231 + $0x8] sm:$0xff]
  %v240 = vld [vmem:[%s231 + $0x10] sm:$0xff]
  %v241 = vld [vmem:[%s231 + $0x18] sm:$0xff]
  %246 = vrot.lane.b32.xlu0 %v238, 127
  %v247 = vpop.permute.xlu0 %246
  %248 = vrot.lane.b32.xlu0 %v239, 127
  %v249 = vpop.permute.xlu0 %248
  %250 = vrot.lane.b32.xlu0 %v240, 127
  %v251 = vpop.permute.xlu0 %250
  %252 = vrot.lane.b32.xlu0 %v241, 127
  %v253 = vpop.permute.xlu0 %252
  %v254 = vsel %vm39, %v247, %v249
  %v255 = vsel %vm39, %v249, %v251
  %v256 = vsel %vm39, %v251, %v253
  %260 = vst [vmem:[#allocation2 + $0x48] sm:$0xff] %v254
  %261 = vst [vmem:[#allocation2 + $0x50] sm:$0xff] %v255
  %262 = vst [vmem:[#allocation2 + $0x58] sm:$0xff] %v256
  %v263 = vld [vmem:[%s231] sm:$0xff]
  %v264 = vld [vmem:[%s231 + $0x8] sm:$0xff]
  %v265 = vld [vmem:[%s231 + $0x10] sm:$0xff]
  %v266 = vld [vmem:[%s231 + $0x18] sm:$0xff]
  %271 = vrot.lane.b32.xlu0 %v263, 126
  %v272 = vpop.permute.xlu0 %271
  %273 = vrot.lane.b32.xlu0 %v264, 126
  %v274 = vpop.permute.xlu0 %273
  %275 = vrot.lane.b32.xlu0 %v265, 126
  %v276 = vpop.permute.xlu0 %275
  %277 = vrot.lane.b32.xlu0 %v266, 126
  %v278 = vpop.permute.xlu0 %277
  %v279 = vsel %vm65, %v272, %v274
  %v280 = vsel %vm65, %v274, %v276
  %v281 = vsel %vm65, %v276, %v278
  %285 = vst [vmem:[#allocation2 + $0x78] sm:$0xff] %v279
  %286 = vst [vmem:[#allocation2 + $0x80] sm:$0xff] %v280
  %287 = vst [vmem:[#allocation2 + $0x88] sm:$0xff] %v281
  %v288 = vld [vmem:[%s231] sm:$0xff]
  %v289 = vld [vmem:[%s231 + $0x8] sm:$0xff]
  %v290 = vld [vmem:[%s231 + $0x10] sm:$0xff]
  %v291 = vld [vmem:[%s231 + $0x18] sm:$0xff]
  %296 = vrot.lane.b32.xlu0 %v288, 110
  %v297 = vpop.permute.xlu0 %296
  %298 = vrot.lane.b32.xlu0 %v289, 110
  %v299 = vpop.permute.xlu0 %298
  %300 = vrot.lane.b32.xlu0 %v290, 110
  %v301 = vpop.permute.xlu0 %300
  %302 = vrot.lane.b32.xlu0 %v291, 110
  %v303 = vpop.permute.xlu0 %302
  %v304 = vsel %vm91, %v297, %v299
  %v305 = vsel %vm91, %v299, %v301
  %v306 = vsel %vm91, %v301, %v303
  %310 = vst [vmem:[#allocation2 + $0xa8] sm:$0xff] %v304
  %311 = vst [vmem:[#allocation2 + $0xb0] sm:$0xff] %v305
  %312 = vst [vmem:[#allocation2 + $0xb8] sm:$0xff] %v306
  %v313 = vld [vmem:[%s231] sm:$0xff]
  %v314 = vld [vmem:[%s231 + $0x8] sm:$0xff]
  %v315 = vld [vmem:[%s231 + $0x10] sm:$0xff]
  %v316 = vld [vmem:[%s231 + $0x18] sm:$0xff]
  %321 = vrot.lane.b32.xlu0 %v313, 109
  %v322 = vpop.permute.xlu0 %321
  %323 = vrot.lane.b32.xlu0 %v314, 109
  %v324 = vpop.permute.xlu0 %323
  %325 = vrot.lane.b32.xlu0 %v315, 109
  %v326 = vpop.permute.xlu0 %325
  %327 = vrot.lane.b32.xlu0 %v316, 109
  %v328 = vpop.permute.xlu0 %327
  %v329 = vsel %vm117, %v322, %v324
  %v330 = vsel %vm117, %v324, %v326
  %v331 = vsel %vm117, %v326, %v328
  %335 = vst [vmem:[#allocation2 + $0xd8] sm:$0xff] %v329
  %336 = vst [vmem:[#allocation2 + $0xe0] sm:$0xff] %v330
  %337 = vst [vmem:[#allocation2 + $0xe8] sm:$0xff] %v331
  %v338 = vld [vmem:[%s231] sm:$0xff]
  %v339 = vld [vmem:[%s231 + $0x8] sm:$0xff]
  %v340 = vld [vmem:[%s231 + $0x10] sm:$0xff]
  %v341 = vld [vmem:[%s231 + $0x18] sm:$0xff]
  %346 = vrot.lane.b32.xlu0 %v338, 108
  %v347 = vpop.permute.xlu0 %346
  %348 = vrot.lane.b32.xlu0 %v339, 108
  %v349 = vpop.permute.xlu0 %348
  %350 = vrot.lane.b32.xlu0 %v340, 108
  %v351 = vpop.permute.xlu0 %350
  %352 = vrot.lane.b32.xlu0 %v341, 108
  %v353 = vpop.permute.xlu0 %352
  %v354 = vsel %vm143, %v347, %v349
  %v355 = vsel %vm143, %v349, %v351
  %v356 = vsel %vm143, %v351, %v353
  %360 = vst [vmem:[#allocation2 + $0x108] sm:$0xff] %v354
  %361 = vst [vmem:[#allocation2 + $0x110] sm:$0xff] %v355
  %362 = vst [vmem:[#allocation2 + $0x118] sm:$0xff] %v356
  %v363 = vld [vmem:[%s231] sm:$0xff]
  %v364 = vld [vmem:[%s231 + $0x8] sm:$0xff]
  %v365 = vld [vmem:[%s231 + $0x10] sm:$0xff]
  %v366 = vld [vmem:[%s231 + $0x18] sm:$0xff]
  %371 = vrot.lane.b32.xlu0 %v363, 92
  %v372 = vpop.permute.xlu0 %371
  %373 = vrot.lane.b32.xlu0 %v364, 92
  %v374 = vpop.permute.xlu0 %373
  %375 = vrot.lane.b32.xlu0 %v365, 92
  %v376 = vpop.permute.xlu0 %375
  %377 = vrot.lane.b32.xlu0 %v366, 92
  %v378 = vpop.permute.xlu0 %377
  %v379 = vsel %vm169, %v372, %v374
  %v380 = vsel %vm169, %v374, %v376
  %v381 = vsel %vm169, %v376, %v378
  %385 = vst [vmem:[#allocation2 + $0x138] sm:$0xff] %v379
  %386 = vst [vmem:[#allocation2 + $0x140] sm:$0xff] %v380
  %387 = vst [vmem:[#allocation2 + $0x148] sm:$0xff] %v381
  %v388 = vld [vmem:[%s231] sm:$0xff]
  %v389 = vld [vmem:[%s231 + $0x8] sm:$0xff]
  %v390 = vld [vmem:[%s231 + $0x10] sm:$0xff]
  %v391 = vld [vmem:[%s231 + $0x18] sm:$0xff]
  %396 = vrot.lane.b32.xlu0 %v388, 91
  %v397 = vpop.permute.xlu0 %396
  %398 = vrot.lane.b32.xlu0 %v389, 91
  %v399 = vpop.permute.xlu0 %398
  %400 = vrot.lane.b32.xlu0 %v390, 91
  %v401 = vpop.permute.xlu0 %400
  %402 = vrot.lane.b32.xlu0 %v391, 91
  %v403 = vpop.permute.xlu0 %402
  %v404 = vsel %vm195, %v397, %v399
  %v405 = vsel %vm195, %v399, %v401
  %v406 = vsel %vm195, %v401, %v403
  %410 = vst [vmem:[#allocation2 + $0x168] sm:$0xff] %v404
  %411 = vst [vmem:[#allocation2 + $0x170] sm:$0xff] %v405
  %412 = vst [vmem:[#allocation2 + $0x178] sm:$0xff] %v406
  %v413 = vld [vmem:[%s231] sm:$0xff]
  %v414 = vld [vmem:[%s231 + $0x8] sm:$0xff]
  %v415 = vld [vmem:[%s231 + $0x10] sm:$0xff]
  %v416 = vld [vmem:[%s231 + $0x18] sm:$0xff]
  %421 = vrot.lane.b32.xlu0 %v413, 90
  %v422 = vpop.permute.xlu0 %421
  %423 = vrot.lane.b32.xlu0 %v414, 90
  %v424 = vpop.permute.xlu0 %423
  %425 = vrot.lane.b32.xlu0 %v415, 90
  %v426 = vpop.permute.xlu0 %425
  %427 = vrot.lane.b32.xlu0 %v416, 90
  %v428 = vpop.permute.xlu0 %427
  %v429 = vsel %vm221, %v422, %v424
  %v430 = vsel %vm221, %v424, %v426
  %v431 = vsel %vm221, %v426, %v428
  %435 = vst [vmem:[#allocation2 + $0x198] sm:$0xff] %v429
  %436 = vst [vmem:[#allocation2 + $0x1a0] sm:$0xff] %v430
  %437 = vst [vmem:[#allocation2 + $0x1a8] sm:$0xff] %v431
  %v438 = vld [vmem:[%s1] sm:$0xff]
  %v439 = vld [vmem:[#allocation2] sm:$0xff]
  %v440 = vld [vmem:[#allocation2 + $0x8] sm:$0xff]
  %v441 = vld [vmem:[#allocation2 + $0x10] sm:$0xff]
  %v442 = vld [vmem:[#allocation2 + $0x18] sm:$0xff]
  %v443 = vld [vmem:[#allocation2 + $0x20] sm:$0xff]
  %v444 = vld [vmem:[#allocation2 + $0x28] sm:$0xff]
  %v445 = vld [vmem:[#allocation2 + $0x30] sm:$0xff]
  %v446 = vld [vmem:[#allocation2 + $0x38] sm:$0xff]
  %v447 = vld [vmem:[#allocation2 + $0x40] sm:$0xff]
  %v448 = vld [vmem:[#allocation2 + $0x48] sm:$0xff]
  %v449 = vld [vmem:[#allocation2 + $0x50] sm:$0xff]
  %v450 = vld [vmem:[#allocation2 + $0x58] sm:$0xff]
  %v451 = vld [vmem:[#allocation2 + $0x60] sm:$0xff]
  %v452 = vld [vmem:[#allocation2 + $0x68] sm:$0xff]
  %v453 = vld [vmem:[#allocation2 + $0x70] sm:$0xff]
  %v454 = vld [vmem:[#allocation2 + $0x78] sm:$0xff]
  %v455 = vld [vmem:[#allocation2 + $0x80] sm:$0xff]
  %v456 = vld [vmem:[#allocation2 + $0x88] sm:$0xff]
  %v457 = vld [vmem:[#allocation2 + $0x90] sm:$0xff]
  %v458 = vld [vmem:[#allocation2 + $0x98] sm:$0xff]
  %v459 = vld [vmem:[#allocation2 + $0xa0] sm:$0xff]
  %v460 = vld [vmem:[#allocation2 + $0xa8] sm:$0xff]
  %v461 = vld [vmem:[#allocation2 + $0xb0] sm:$0xff]
  %v462 = vld [vmem:[#allocation2 + $0xb8] sm:$0xff]
  %v463 = vld [vmem:[#allocation2 + $0xc0] sm:$0xff]
  %v464 = vld [vmem:[#allocation2 + $0xc8] sm:$0xff]
  %v465 = vld [vmem:[#allocation2 + $0xd0] sm:$0xff]
  %v466 = vld [vmem:[#allocation2 + $0xd8] sm:$0xff]
  %v467 = vld [vmem:[#allocation2 + $0xe0] sm:$0xff]
  %v468 = vld [vmem:[#allocation2 + $0xe8] sm:$0xff]
  %v469 = vld [vmem:[#allocation2 + $0xf0] sm:$0xff]
  %v470 = vld [vmem:[#allocation2 + $0xf8] sm:$0xff]
  %v471 = vld [vmem:[#allocation2 + $0x100] sm:$0xff]
  %v472 = vld [vmem:[#allocation2 + $0x108] sm:$0xff]
  %v473 = vld [vmem:[#allocation2 + $0x110] sm:$0xff]
  %v474 = vld [vmem:[#allocation2 + $0x118] sm:$0xff]
  %v475 = vld [vmem:[#allocation2 + $0x120] sm:$0xff]
  %v476 = vld [vmem:[#allocation2 + $0x128] sm:$0xff]
  %v477 = vld [vmem:[#allocation2 + $0x130] sm:$0xff]
  %v478 = vld [vmem:[#allocation2 + $0x138] sm:$0xff]
  %v479 = vld [vmem:[#allocation2 + $0x140] sm:$0xff]
  %v480 = vld [vmem:[#allocation2 + $0x148] sm:$0xff]
  %v481 = vld [vmem:[#allocation2 + $0x150] sm:$0xff]
  %v482 = vld [vmem:[#allocation2 + $0x158] sm:$0xff]
  %v483 = vld [vmem:[#allocation2 + $0x160] sm:$0xff]
  %v484 = vld [vmem:[#allocation2 + $0x168] sm:$0xff]
  %v485 = vld [vmem:[#allocation2 + $0x170] sm:$0xff]
  %v486 = vld [vmem:[#allocation2 + $0x178] sm:$0xff]
  %v487 = vld [vmem:[#allocation2 + $0x180] sm:$0xff]
  %v488 = vld [vmem:[#allocation2 + $0x188] sm:$0xff]
  %v489 = vld [vmem:[#allocation2 + $0x190] sm:$0xff]
  %v490 = vld [vmem:[#allocation2 + $0x198] sm:$0xff]
  %v491 = vld [vmem:[#allocation2 + $0x1a0] sm:$0xff]
  %v492 = vld [vmem:[#allocation2 + $0x1a8] sm:$0xff]
  %vm493 = vcmask 588800
  %v495 = vsel %vm493, %v438, 0
  %497 = vmatprep.subr.mxu0 %v440
  %498 = vmatpush1.msra.mxu0 %v439
  %499 = vmatprep.subr.mxu0 %v446
  %500 = vmatpush1.msra.mxu0 %v445
  %501 = vmatprep.subr.mxu0 %v452
  %502 = vmatpush1.msra.mxu0 %v451
  %503 = vmatprep.subr.mxu0 %v458
  %504 = vmatpush1.msra.mxu0 %v457
  %505 = vmatprep.subr.mxu0 %v464
  %506 = vmatpush1.msra.mxu0 %v463
  %507 = vmatprep.subr.mxu0 %v470
  %508 = vmatpush1.msra.mxu0 %v469
  %509 = vmatprep.subr.mxu0 %v476
  %510 = vmatpush1.msra.mxu0 %v475
  %511 = vmatprep.subr.mxu0 %v482
  %512 = vmatpush1.msra.mxu0 %v481
  %513 = vmatprep.subr.mxu0 %v488
  %514 = vmatpush1.msra.mxu0 %v487
  %515 = vmatprep.subr.mxu0 0.0
  %516 = vmatpush1.msra.mxu0 0.0
  %517 = vmatprep.subr.mxu0 0.0
  %518 = vmatpush1.msra.mxu0 0.0
  %519 = vmatprep.subr.mxu0 0.0
  %520 = vmatpush1.msra.mxu0 0.0
  %521 = vmatprep.subr.mxu0 0.0
  %522 = vmatpush1.msra.mxu0 0.0
  %523 = vmatprep.subr.mxu0 0.0
  %524 = vmatpush1.msra.mxu0 0.0
  %525 = vmatprep.subr.mxu0 0.0
  %526 = vmatpush1.msra.mxu0 0.0
  %527 = vmatprep.subr.mxu0 0.0
  %528 = vmatpush1.msra.mxu0 0.0
  %529 = vmatprep.subr.mxu0 0.0
  %530 = vmatpush1.msra.mxu0 0.0
  %531 = vmatprep.subr.mxu0 0.0
  %532 = vmatpush1.msra.mxu0 0.0
  %533 = vmatprep.subr.mxu0 0.0
  %534 = vmatpush1.msra.mxu0 0.0
  %535 = vmatprep.subr.mxu0 0.0
  %536 = vmatpush1.msra.mxu0 0.0
  %537 = vmatprep.subr.mxu0 0.0
  %538 = vmatpush1.msra.mxu0 0.0
  %539 = vmatprep.subr.mxu0 0.0
  %540 = vmatpush1.msra.mxu0 0.0
  %541 = vmatprep.subr.mxu0 0.0
  %542 = vmatpush1.msra.mxu0 0.0
  %543 = vmatprep.subr.mxu0 0.0
  %544 = vmatpush1.msra.mxu0 0.0
  %545 = vmatprep.subr.mxu0 0.0
  %546 = vmatpush1.msra.mxu0 0.0
  %547 = vmatprep.subr.mxu0 0.0
  %548 = vmatpush1.msra.mxu0 0.0
  %549 = vmatprep.subr.mxu0 0.0
  %550 = vmatpush1.msra.mxu0 0.0
  %551 = vmatprep.subr.mxu0 0.0
  %552 = vmatpush1.msra.mxu0 0.0
  %553 = vmatprep.subr.mxu0 0.0
  %554 = vmatpush1.msra.mxu0 0.0
  %555 = vmatprep.subr.mxu0 0.0
  %556 = vmatpush1.msra.mxu0 0.0
  %557 = vmatprep.subr.mxu0 0.0
  %558 = vmatpush1.msra.mxu0 0.0
  %559 = vmatprep.subr.mxu0 0.0
  %560 = vmatpush1.msra.mxu0 0.0
  %561 = vmatprep.mubr.f32.mxu0 0.0
  %562 = vmatmul.mubr.f32.gmra.mrb[0].mxu0 %v495
  %v563 = vpop.f32.mrb[0].mxu0
  %v564 = vadd.f32 0.0, %v563
  %v565 = vpop.f32.mrb[0].mxu0
  %v566 = vadd.f32 0.0, %v565
  %567 = vdwg.mxu0
  %568 = vmatprep.subr.mxu0 %v442
  %569 = vmatpush1.msra.mxu0 %v441
  %570 = vmatprep.subr.mxu0 %v448
  %571 = vmatpush1.msra.mxu0 %v447
  %572 = vmatprep.subr.mxu0 %v454
  %573 = vmatpush1.msra.mxu0 %v453
  %574 = vmatprep.subr.mxu0 %v460
  %575 = vmatpush1.msra.mxu0 %v459
  %576 = vmatprep.subr.mxu0 %v466
  %577 = vmatpush1.msra.mxu0 %v465
  %578 = vmatprep.subr.mxu0 %v472
  %579 = vmatpush1.msra.mxu0 %v471
  %580 = vmatprep.subr.mxu0 %v478
  %581 = vmatpush1.msra.mxu0 %v477
  %582 = vmatprep.subr.mxu0 %v484
  %583 = vmatpush1.msra.mxu0 %v483
  %584 = vmatprep.subr.mxu0 %v490
  %585 = vmatpush1.msra.mxu0 %v489
  %586 = vmatprep.subr.mxu0 0.0
  %587 = vmatpush1.msra.mxu0 0.0
  %588 = vmatprep.subr.mxu0 0.0
  %589 = vmatpush1.msra.mxu0 0.0
  %590 = vmatprep.subr.mxu0 0.0
  %591 = vmatpush1.msra.mxu0 0.0
  %592 = vmatprep.subr.mxu0 0.0
  %593 = vmatpush1.msra.mxu0 0.0
  %594 = vmatprep.subr.mxu0 0.0
  %595 = vmatpush1.msra.mxu0 0.0
  %596 = vmatprep.subr.mxu0 0.0
  %597 = vmatpush1.msra.mxu0 0.0
  %598 = vmatprep.subr.mxu0 0.0
  %599 = vmatpush1.msra.mxu0 0.0
  %600 = vmatprep.subr.mxu0 0.0
  %601 = vmatpush1.msra.mxu0 0.0
  %602 = vmatprep.subr.mxu0 0.0
  %603 = vmatpush1.msra.mxu0 0.0
  %604 = vmatprep.subr.mxu0 0.0
  %605 = vmatpush1.msra.mxu0 0.0
  %606 = vmatprep.subr.mxu0 0.0
  %607 = vmatpush1.msra.mxu0 0.0
  %608 = vmatprep.subr.mxu0 0.0
  %609 = vmatpush1.msra.mxu0 0.0
  %610 = vmatprep.subr.mxu0 0.0
  %611 = vmatpush1.msra.mxu0 0.0
  %612 = vmatprep.subr.mxu0 0.0
  %613 = vmatpush1.msra.mxu0 0.0
  %614 = vmatprep.subr.mxu0 0.0
  %615 = vmatpush1.msra.mxu0 0.0
  %616 = vmatprep.subr.mxu0 0.0
  %617 = vmatpush1.msra.mxu0 0.0
  %618 = vmatprep.subr.mxu0 0.0
  %619 = vmatpush1.msra.mxu0 0.0
  %620 = vmatprep.subr.mxu0 0.0
  %621 = vmatpush1.msra.mxu0 0.0
  %622 = vmatprep.subr.mxu0 0.0
  %623 = vmatpush1.msra.mxu0 0.0
  %624 = vmatprep.subr.mxu0 0.0
  %625 = vmatpush1.msra.mxu0 0.0
  %626 = vmatprep.subr.mxu0 0.0
  %627 = vmatpush1.msra.mxu0 0.0
  %628 = vmatprep.subr.mxu0 0.0
  %629 = vmatpush1.msra.mxu0 0.0
  %630 = vmatprep.subr.mxu0 0.0
  %631 = vmatpush1.msra.mxu0 0.0
  %632 = vmatprep.mubr.f32.mxu0 0.0
  %633 = vmatmul.mubr.f32.gmra.mrb[0].mxu0 %v495
  %v634 = vpop.f32.mrb[0].mxu0
  %v635 = vadd.f32 0.0, %v634
  %v636 = vpop.f32.mrb[0].mxu0
  %v637 = vadd.f32 0.0, %v636
  %638 = vdwg.mxu0
  %639 = vmatprep.subr.mxu0 %v444
  %640 = vmatpush1.msra.mxu0 %v443
  %641 = vmatprep.subr.mxu0 %v450
  %642 = vmatpush1.msra.mxu0 %v449
  %643 = vmatprep.subr.mxu0 %v456
  %644 = vmatpush1.msra.mxu0 %v455
  %645 = vmatprep.subr.mxu0 %v462
  %646 = vmatpush1.msra.mxu0 %v461
  %647 = vmatprep.subr.mxu0 %v468
  %648 = vmatpush1.msra.mxu0 %v467
  %649 = vmatprep.subr.mxu0 %v474
  %650 = vmatpush1.msra.mxu0 %v473
  %651 = vmatprep.subr.mxu0 %v480
  %652 = vmatpush1.msra.mxu0 %v479
  %653 = vmatprep.subr.mxu0 %v486
  %654 = vmatpush1.msra.mxu0 %v485
  %655 = vmatprep.subr.mxu0 %v492
  %656 = vmatpush1.msra.mxu0 %v491
  %657 = vmatprep.subr.mxu0 0.0
  %658 = vmatpush1.msra.mxu0 0.0
  %659 = vmatprep.subr.mxu0 0.0
  %660 = vmatpush1.msra.mxu0 0.0
  %661 = vmatprep.subr.mxu0 0.0
  %662 = vmatpush1.msra.mxu0 0.0
  %663 = vmatprep.subr.mxu0 0.0
  %664 = vmatpush1.msra.mxu0 0.0
  %665 = vmatprep.subr.mxu0 0.0
  %666 = vmatpush1.msra.mxu0 0.0
  %667 = vmatprep.subr.mxu0 0.0
  %668 = vmatpush1.msra.mxu0 0.0
  %669 = vmatprep.subr.mxu0 0.0
  %670 = vmatpush1.msra.mxu0 0.0
  %671 = vmatprep.subr.mxu0 0.0
  %672 = vmatpush1.msra.mxu0 0.0
  %673 = vmatprep.subr.mxu0 0.0
  %674 = vmatpush1.msra.mxu0 0.0
  %675 = vmatprep.subr.mxu0 0.0
  %676 = vmatpush1.msra.mxu0 0.0
  %677 = vmatprep.subr.mxu0 0.0
  %678 = vmatpush1.msra.mxu0 0.0
  %679 = vmatprep.subr.mxu0 0.0
  %680 = vmatpush1.msra.mxu0 0.0
  %681 = vmatprep.subr.mxu0 0.0
  %682 = vmatpush1.msra.mxu0 0.0
  %683 = vmatprep.subr.mxu0 0.0
  %684 = vmatpush1.msra.mxu0 0.0
  %685 = vmatprep.subr.mxu0 0.0
  %686 = vmatpush1.msra.mxu0 0.0
  %687 = vmatprep.subr.mxu0 0.0
  %688 = vmatpush1.msra.mxu0 0.0
  %689 = vmatprep.subr.mxu0 0.0
  %690 = vmatpush1.msra.mxu0 0.0
  %691 = vmatprep.subr.mxu0 0.0
  %692 = vmatpush1.msra.mxu0 0.0
  %693 = vmatprep.subr.mxu0 0.0
  %694 = vmatpush1.msra.mxu0 0.0
  %695 = vmatprep.subr.mxu0 0.0
  %696 = vmatpush1.msra.mxu0 0.0
  %697 = vmatprep.subr.mxu0 0.0
  %698 = vmatpush1.msra.mxu0 0.0
  %699 = vmatprep.subr.mxu0 0.0
  %700 = vmatpush1.msra.mxu0 0.0
  %701 = vmatprep.subr.mxu0 0.0
  %702 = vmatpush1.msra.mxu0 0.0
  %703 = vmatprep.mubr.f32.mxu0 0.0
  %704 = vmatmul.mubr.f32.gmra.mrb[0].mxu0 %v495
  %v705 = vpop.f32.mrb[0].mxu0
  %v706 = vadd.f32 0.0, %v705
  %v707 = vpop.f32.mrb[0].mxu0
  %v708 = vadd.f32 0.0, %v707
  %709 = vdwg.mxu0
  %v710 = vld [vmem:[%s2] sm:$0xff]
  %712 = vset.pattern.permute.xlu0 0
  %713 = vperm.xlu0 %712, %v710
  %v714 = vpop.permute.xlu0 %713
  %v716 = vmul.f32 %v564, %v714
  %v717 = vmul.f32 %v566, %v714
  %v718 = vmul.f32 %v635, %v714
  %v719 = vmul.f32 %v637, %v714
  %v720 = vmul.f32 %v706, %v714
  %v721 = vmul.f32 %v708, %v714
  %v722 = vld [vmem:[%s3] sm:$0xff]
  %724 = vset.pattern.permute.xlu0 0
  %725 = vperm.xlu0 %724, %v722
  %v726 = vpop.permute.xlu0 %725
  %v728 = vadd.f32 %v716, %v726
  %v729 = vadd.f32 %v717, %v726
  %v730 = vadd.f32 %v718, %v726
  %v731 = vadd.f32 %v719, %v726
  %v732 = vadd.f32 %v720, %v726
  %v733 = vadd.f32 %v721, %v726
  %v734 = vmax.f32 %v728, 0.0
  %v735 = vmax.f32 %v729, 0.0
  %v736 = vmax.f32 %v730, 0.0
  %v737 = vmax.f32 %v731, 0.0
  %v738 = vmax.f32 %v732, 0.0
  %v739 = vmax.f32 %v733, 0.0
  %740 = vst [vmem:[%s4] sm:$0xff] %v734
  %741 = vst [vmem:[%s4 + $0x8] sm:$0xff] %v735
  %742 = vst [vmem:[%s4 + $0x10] sm:$0xff] %v736
  %s743 = scalar_lea.vmem %s4, 24
  %744 = vst [vmem:[%s743] sm:$0xff] %v737
  %745 = vst [vmem:[%s743 + $0x8] sm:$0xff] %v738
  %746 = vst [vmem:[%s743 + $0x10] sm:$0xff] %v739
  // Predicated region
  $region18: #{conv2d_bn_relu.1} parent=0 // pred_check
    _
  $region19: #{conv2d_bn_relu.1} parent=0 // pred_check_branch
    %748 = sbr.rel (0) target = $region21
  $region20: #{conv2d_bn_relu.1} parent=0 // pred_region
    _
  $region21: #{conv2d_bn_relu.1} parent=0 // pred_fallthru
    _
  // Predicated region
  $region22: #{conv2d_bn_relu.1} parent=0 // pred_check
    _
  $region23: #{conv2d_bn_relu.1} parent=0 // pred_check_branch
    %750 = sbr.rel (0) target = $region25
  $region24: #{conv2d_bn_relu.1} parent=0 // pred_region
    _
  $region25: #{conv2d_bn_relu.1} parent=0 // pred_fallthru
    _

</llo_original>
